<compile_context>
chip_gen: v6e
topology: v6e:2x2x1
jax: 0.10.0
libtpu: 0.0.40
codegen_flags: <defaults>
</compile_context>

<pallas_src>
import functools

import jax
import jax.numpy as jnp
from jax import lax
from jax.experimental import pallas as pl
from jax.experimental.pallas import tpu as pltpu


def _lstm_encoder_kernel(x_ref, w_in_ref, b_in_ref, whh_ref, out_ref, *,
                         seq_len, batch_p, h_dim):
    H = h_dim

    # ---- Hoisted input projection: one (T*Bp, 3*Cin) x (3*Cin, 4H) MXU matmul ----
    gates_in = (jnp.dot(x_ref[...], w_in_ref[...],
                        preferred_element_type=jnp.float32)
                + b_in_ref[...])                                   # (T*Bp, 4H)

    h = jnp.zeros((batch_p, H), jnp.float32)
    c = jnp.zeros((batch_p, H), jnp.float32)

    # ---- Recurrence, fully unrolled (T small & static).  Per step: one small
    #      (Bp, H) x (H, 4H) matmul + elementwise gate math. PyTorch gate order i,f,g,o.
    for t in range(seq_len):
        g = (gates_in[t * batch_p:(t + 1) * batch_p, :]
             + jnp.dot(h, whh_ref[...], preferred_element_type=jnp.float32))
        i_g = jax.nn.sigmoid(g[:, 0 * H:1 * H])
        f_g = jax.nn.sigmoid(g[:, 1 * H:2 * H])
        g_g = jnp.tanh(g[:, 2 * H:3 * H])
        o_g = jax.nn.sigmoid(g[:, 3 * H:4 * H])
        c = f_g * c + i_g * g_g
        h = o_g * jnp.tanh(c)

    out_ref[...] = h                       # single final (Bp, H) store


def lstm_encoder_pallas(x, params):
    """x: (B, T, 3) float32  ->  final_h: (B, h_dim) float32."""
    B, T, Cin = x.shape
    wc_flat = params["wc_flat"]      # (3*Cin, E)
    bc = params["bc"]                # (1, E)
    wih_t = params["wih_t"]          # (E, 4H)
    whh_t = params["whh_t"]          # (H, 4H)
    b_gates = params["b_gates"]      # (1, 4H)
    H = whh_t.shape[0]
    K = 3 * Cin

    # ---- Fuse Conv1d into the LSTM input projection (tiny wrapper-side matmuls) ----
    w_in = wc_flat @ wih_t                         # (3*Cin, 4H)
    b_in = bc @ wih_t + b_gates                    # (1, 4H)

    # ---- Glue: zero-padded 3-tap conv window, seq-major, batch padded to 8 rows ----
    x_pad = jnp.pad(x, ((0, 0), (1, 1), (0, 0)))                       # (B, T+2, 3)
    x_cat = jnp.concatenate(
        [x_pad[:, 0:T, :], x_pad[:, 1:T + 1, :], x_pad[:, 2:T + 2, :]],
        axis=-1)                                                       # (B, T, 9)
    x_seq = jnp.transpose(x_cat, (1, 0, 2))                            # (T, B, 9)
    Bp = ((B + 7) // 8) * 8                                            # sublane pad
    if Bp != B:
        x_seq = jnp.pad(x_seq, ((0, 0), (0, Bp - B), (0, 0)))
    x2d = x_seq.reshape(T * Bp, K)                                     # row = t*Bp + b

    kernel = functools.partial(_lstm_encoder_kernel,
                               seq_len=T, batch_p=Bp, h_dim=H)
    out = pl.pallas_call(
        kernel,
        out_shape=jax.ShapeDtypeStruct((Bp, H), jnp.float32),
        grid_spec=pltpu.PrefetchScalarGridSpec(
            num_scalar_prefetch=0,
            grid=(1,),                                 # single invocation
            in_specs=[
                pl.BlockSpec((T * Bp, K), lambda i: (0, 0)),
                pl.BlockSpec((K, 4 * H), lambda i: (0, 0)),
                pl.BlockSpec((1, 4 * H), lambda i: (0, 0)),
                pl.BlockSpec((H, 4 * H), lambda i: (0, 0)),
            ],
            out_specs=pl.BlockSpec((Bp, H), lambda i: (0, 0)),
        ),
        compiler_params=pltpu.CompilerParams(
            dimension_semantics=("arbitrary",)),
    )(x2d, w_in, b_in, whh_t)
    return out[:B]


def lstm_encoder_ref(x, params):
    """Pure-JAX reference with the ORIGINAL (unfused) decomposition."""
    B, T, Cin = x.shape
    H = params["whh_t"].shape[0]
    x_pad = jnp.pad(x, ((0, 0), (1, 1), (0, 0)))
    x_cat = jnp.concatenate(
        [x_pad[:, 0:T, :], x_pad[:, 1:T + 1, :], x_pad[:, 2:T + 2, :]], axis=-1)
    emb = x_cat @ params["wc_flat"] + params["bc"]            # (B, T, E)
    emb = jnp.transpose(emb, (1, 0, 2))                       # (T, B, E)

    def step(carry, e_t):
        h, c = carry
        gates = e_t @ params["wih_t"] + h @ params["whh_t"] + params["b_gates"]
        i_g = jax.nn.sigmoid(gates[:, 0 * H:1 * H])
        f_g = jax.nn.sigmoid(gates[:, 1 * H:2 * H])
        g_g = jnp.tanh(gates[:, 2 * H:3 * H])
        o_g = jax.nn.sigmoid(gates[:, 3 * H:4 * H])
        c = f_g * c + i_g * g_g
        h = o_g * jnp.tanh(c)
        return (h, c), None

    h0 = jnp.zeros((B, H), jnp.float32)
    (h_fin, _), _ = lax.scan(step, (h0, h0), emb)
    return h_fin


def init_params(key, embedding_dim=32, h_dim=32, in_ch=3):
    ks = jax.random.split(key, 6)
    E, H = embedding_dim, h_dim
    # Conv1d weight: PyTorch layout (E, in_ch, k=3)
    w_conv = jax.random.normal(ks[0], (E, in_ch, 3), jnp.float32) * 0.1
    b_conv = jax.random.normal(ks[1], (E,), jnp.float32) * 0.1
    # Flatten so that index (k*in_ch + c) matches the concatenated window.
    wc_flat = jnp.transpose(w_conv, (2, 1, 0)).reshape(3 * in_ch, E)
    # LSTM weights: PyTorch layout W_ih (4H, E), W_hh (4H, H), gate order i,f,g,o
    w_ih = jax.random.normal(ks[2], (4 * H, E), jnp.float32) * 0.1
    w_hh = jax.random.normal(ks[3], (4 * H, H), jnp.float32) * 0.1
    b_ih = jax.random.normal(ks[4], (4 * H,), jnp.float32) * 0.1
    b_hh = jax.random.normal(ks[5], (4 * H,), jnp.float32) * 0.1
    return {
        "wc_flat": wc_flat,
        "bc": b_conv.reshape(1, E),
        "wih_t": w_ih.T,                         # (E, 4H)
        "whh_t": w_hh.T,                         # (H, 4H)
        "b_gates": (b_ih + b_hh).reshape(1, 4 * H),
    }


if __name__ == "__main__":
    key = jax.random.PRNGKey(0)
    k_x, k_p = jax.random.split(key)

    batch, history_size, in_ch = 4, 8, 3
    embedding_dim, h_dim = 32, 32

    # actor_state: (batch, history_size, 3) = [x, y, yaw]
    actor_state = jax.random.normal(k_x, (batch, history_size, in_ch), jnp.float32)
    params = init_params(k_p, embedding_dim=embedding_dim, h_dim=h_dim, in_ch=in_ch)

    out = lstm_encoder_pallas(actor_state, params)
    out = jax.block_until_ready(out)

    ref = lstm_encoder_ref(actor_state, params)
    assert out.shape == (batch, h_dim), out.shape
    assert jnp.allclose(out, ref, atol=1e-4, rtol=1e-4), \
        f"max err {jnp.max(jnp.abs(out - ref))}"

    print("KERNEL_OK")
</pallas_src>

<mosaic_0001>
module attributes {stable_mosaic.version = 11 : i64} {
  func.func @_lstm_encoder_kernel(%arg0: i32, %arg1: memref<64x9xf32, #tpu.memory_space<vmem>>, %arg2: memref<9x128xf32, #tpu.memory_space<vmem>>, %arg3: memref<1x128xf32, #tpu.memory_space<vmem>>, %arg4: memref<32x128xf32, #tpu.memory_space<vmem>>, %arg5: memref<8x32xf32, #tpu.memory_space<vmem>>) attributes {dimension_semantics = [#tpu.dimension_semantics<arbitrary>], iteration_bounds = array<i64: 1>, scalar_prefetch = 0 : i64, scratch_operands = 0 : i64, tpu.core_type = #tpu.core_type<tc>, window_params = [{pipeline_mode = #tpu.pipeline_mode<synchronous>, transform_indices = @transform_0, window_bounds = array<i64: 64, 9>}, {pipeline_mode = #tpu.pipeline_mode<synchronous>, transform_indices = @transform_1, window_bounds = array<i64: 9, 128>}, {pipeline_mode = #tpu.pipeline_mode<synchronous>, transform_indices = @transform_2, window_bounds = array<i64: 1, 128>}, {pipeline_mode = #tpu.pipeline_mode<synchronous>, transform_indices = @transform_3, window_bounds = array<i64: 32, 128>}, {pipeline_mode = #tpu.pipeline_mode<synchronous>, transform_indices = @transform_4, window_bounds = array<i64: 8, 32>}]} {
    %c0 = arith.constant 0 : index
    %c0_0 = arith.constant 0 : index
    %0 = vector.load %arg1[%c0, %c0_0] : memref<64x9xf32, #tpu.memory_space<vmem>>, vector<64x9xf32>
    %c0_1 = arith.constant 0 : index
    %c0_2 = arith.constant 0 : index
    %1 = vector.load %arg2[%c0_1, %c0_2] : memref<9x128xf32, #tpu.memory_space<vmem>>, vector<9x128xf32>
    %cst = arith.constant dense<0.000000e+00> : vector<64x128xf32>
    %2 = tpu.matmul %0, %1, %cst {dimension_numbers = #tpu.dot_dimension_numbers<[1], [0], [0], [1], [0, 0, 1, 1], [], []>} : vector<64x9xf32>, vector<9x128xf32>, vector<64x128xf32> -> vector<64x128xf32>
    %c0_3 = arith.constant 0 : index
    %c0_4 = arith.constant 0 : index
    %3 = vector.load %arg3[%c0_3, %c0_4] : memref<1x128xf32, #tpu.memory_space<vmem>>, vector<1x128xf32>
    %4 = vector.broadcast %3 : vector<1x128xf32> to vector<64x128xf32>
    %5 = arith.addf %2, %4 : vector<64x128xf32>
    %cst_5 = arith.constant 0.000000e+00 : f32
    %6 = vector.broadcast %cst_5 : f32 to vector<8x32xf32>
    %cst_6 = arith.constant 0.000000e+00 : f32
    %7 = vector.broadcast %cst_6 : f32 to vector<8x32xf32>
    %8 = vector.extract_strided_slice %5 {offsets = [0, 0], sizes = [8, 128], strides = [1, 1]} : vector<64x128xf32> to vector<8x128xf32>
    %c0_7 = arith.constant 0 : index
    %c0_8 = arith.constant 0 : index
    %9 = vector.load %arg4[%c0_7, %c0_8] : memref<32x128xf32, #tpu.memory_space<vmem>>, vector<32x128xf32>
    %cst_9 = arith.constant dense<0.000000e+00> : vector<8x128xf32>
    %10 = tpu.matmul %6, %9, %cst_9 {dimension_numbers = #tpu.dot_dimension_numbers<[1], [0], [0], [1], [0, 0, 1, 1], [], []>} : vector<8x32xf32>, vector<32x128xf32>, vector<8x128xf32> -> vector<8x128xf32>
    %11 = arith.addf %8, %10 : vector<8x128xf32>
    %12 = vector.extract_strided_slice %11 {offsets = [0, 0], sizes = [8, 32], strides = [1, 1]} : vector<8x128xf32> to vector<8x32xf32>
    %13 = arith.negf %12 : vector<8x32xf32>
    %14 = math.exp %13 : vector<8x32xf32>
    %cst_10 = arith.constant 1.000000e+00 : f32
    %15 = vector.broadcast %cst_10 : f32 to vector<8x32xf32>
    %16 = arith.addf %15, %14 : vector<8x32xf32>
    %17 = arith.divf %15, %16 : vector<8x32xf32>
    %18 = vector.extract_strided_slice %11 {offsets = [0, 32], sizes = [8, 32], strides = [1, 1]} : vector<8x128xf32> to vector<8x32xf32>
    %19 = arith.negf %18 : vector<8x32xf32>
    %20 = math.exp %19 : vector<8x32xf32>
    %cst_11 = arith.constant 1.000000e+00 : f32
    %21 = vector.broadcast %cst_11 : f32 to vector<8x32xf32>
    %22 = arith.addf %21, %20 : vector<8x32xf32>
    %23 = arith.divf %21, %22 : vector<8x32xf32>
    %24 = vector.extract_strided_slice %11 {offsets = [0, 64], sizes = [8, 32], strides = [1, 1]} : vector<8x128xf32> to vector<8x32xf32>
    %25 = math.tanh %24 : vector<8x32xf32>
    %26 = vector.extract_strided_slice %11 {offsets = [0, 96], sizes = [8, 32], strides = [1, 1]} : vector<8x128xf32> to vector<8x32xf32>
    %27 = arith.negf %26 : vector<8x32xf32>
    %28 = math.exp %27 : vector<8x32xf32>
    %cst_12 = arith.constant 1.000000e+00 : f32
    %29 = vector.broadcast %cst_12 : f32 to vector<8x32xf32>
    %30 = arith.addf %29, %28 : vector<8x32xf32>
    %31 = arith.divf %29, %30 : vector<8x32xf32>
    %32 = arith.mulf %23, %7 : vector<8x32xf32>
    %33 = arith.mulf %17, %25 : vector<8x32xf32>
    %34 = arith.addf %32, %33 : vector<8x32xf32>
    %35 = math.tanh %34 : vector<8x32xf32>
    %36 = arith.mulf %31, %35 : vector<8x32xf32>
    %37 = vector.extract_strided_slice %5 {offsets = [8, 0], sizes = [8, 128], strides = [1, 1]} : vector<64x128xf32> to vector<8x128xf32>
    %c0_13 = arith.constant 0 : index
    %c0_14 = arith.constant 0 : index
    %38 = vector.load %arg4[%c0_13, %c0_14] : memref<32x128xf32, #tpu.memory_space<vmem>>, vector<32x128xf32>
    %cst_15 = arith.constant dense<0.000000e+00> : vector<8x128xf32>
    %39 = tpu.matmul %36, %38, %cst_15 {dimension_numbers = #tpu.dot_dimension_numbers<[1], [0], [0], [1], [0, 0, 1, 1], [], []>} : vector<8x32xf32>, vector<32x128xf32>, vector<8x128xf32> -> vector<8x128xf32>
    %40 = arith.addf %37, %39 : vector<8x128xf32>
    %41 = vector.extract_strided_slice %40 {offsets = [0, 0], sizes = [8, 32], strides = [1, 1]} : vector<8x128xf32> to vector<8x32xf32>
    %42 = arith.negf %41 : vector<8x32xf32>
    %43 = math.exp %42 : vector<8x32xf32>
    %cst_16 = arith.constant 1.000000e+00 : f32
    %44 = vector.broadcast %cst_16 : f32 to vector<8x32xf32>
    %45 = arith.addf %44, %43 : vector<8x32xf32>
    %46 = arith.divf %44, %45 : vector<8x32xf32>
    %47 = vector.extract_strided_slice %40 {offsets = [0, 32], sizes = [8, 32], strides = [1, 1]} : vector<8x128xf32> to vector<8x32xf32>
    %48 = arith.negf %47 : vector<8x32xf32>
    %49 = math.exp %48 : vector<8x32xf32>
    %cst_17 = arith.constant 1.000000e+00 : f32
    %50 = vector.broadcast %cst_17 : f32 to vector<8x32xf32>
    %51 = arith.addf %50, %49 : vector<8x32xf32>
    %52 = arith.divf %50, %51 : vector<8x32xf32>
    %53 = vector.extract_strided_slice %40 {offsets = [0, 64], sizes = [8, 32], strides = [1, 1]} : vector<8x128xf32> to vector<8x32xf32>
    %54 = math.tanh %53 : vector<8x32xf32>
    %55 = vector.extract_strided_slice %40 {offsets = [0, 96], sizes = [8, 32], strides = [1, 1]} : vector<8x128xf32> to vector<8x32xf32>
    %56 = arith.negf %55 : vector<8x32xf32>
    %57 = math.exp %56 : vector<8x32xf32>
    %cst_18 = arith.constant 1.000000e+00 : f32
    %58 = vector.broadcast %cst_18 : f32 to vector<8x32xf32>
    %59 = arith.addf %58, %57 : vector<8x32xf32>
    %60 = arith.divf %58, %59 : vector<8x32xf32>
    %61 = arith.mulf %52, %34 : vector<8x32xf32>
    %62 = arith.mulf %46, %54 : vector<8x32xf32>
    %63 = arith.addf %61, %62 : vector<8x32xf32>
    %64 = math.tanh %63 : vector<8x32xf32>
    %65 = arith.mulf %60, %64 : vector<8x32xf32>
    %66 = vector.extract_strided_slice %5 {offsets = [16, 0], sizes = [8, 128], strides = [1, 1]} : vector<64x128xf32> to vector<8x128xf32>
    %c0_19 = arith.constant 0 : index
    %c0_20 = arith.constant 0 : index
    %67 = vector.load %arg4[%c0_19, %c0_20] : memref<32x128xf32, #tpu.memory_space<vmem>>, vector<32x128xf32>
    %cst_21 = arith.constant dense<0.000000e+00> : vector<8x128xf32>
    %68 = tpu.matmul %65, %67, %cst_21 {dimension_numbers = #tpu.dot_dimension_numbers<[1], [0], [0], [1], [0, 0, 1, 1], [], []>} : vector<8x32xf32>, vector<32x128xf32>, vector<8x128xf32> -> vector<8x128xf32>
    %69 = arith.addf %66, %68 : vector<8x128xf32>
    %70 = vector.extract_strided_slice %69 {offsets = [0, 0], sizes = [8, 32], strides = [1, 1]} : vector<8x128xf32> to vector<8x32xf32>
    %71 = arith.negf %70 : vector<8x32xf32>
    %72 = math.exp %71 : vector<8x32xf32>
    %cst_22 = arith.constant 1.000000e+00 : f32
    %73 = vector.broadcast %cst_22 : f32 to vector<8x32xf32>
    %74 = arith.addf %73, %72 : vector<8x32xf32>
    %75 = arith.divf %73, %74 : vector<8x32xf32>
    %76 = vector.extract_strided_slice %69 {offsets = [0, 32], sizes = [8, 32], strides = [1, 1]} : vector<8x128xf32> to vector<8x32xf32>
    %77 = arith.negf %76 : vector<8x32xf32>
    %78 = math.exp %77 : vector<8x32xf32>
    %cst_23 = arith.constant 1.000000e+00 : f32
    %79 = vector.broadcast %cst_23 : f32 to vector<8x32xf32>
    %80 = arith.addf %79, %78 : vector<8x32xf32>
    %81 = arith.divf %79, %80 : vector<8x32xf32>
    %82 = vector.extract_strided_slice %69 {offsets = [0, 64], sizes = [8, 32], strides = [1, 1]} : vector<8x128xf32> to vector<8x32xf32>
    %83 = math.tanh %82 : vector<8x32xf32>
    %84 = vector.extract_strided_slice %69 {offsets = [0, 96], sizes = [8, 32], strides = [1, 1]} : vector<8x128xf32> to vector<8x32xf32>
    %85 = arith.negf %84 : vector<8x32xf32>
    %86 = math.exp %85 : vector<8x32xf32>
    %cst_24 = arith.constant 1.000000e+00 : f32
    %87 = vector.broadcast %cst_24 : f32 to vector<8x32xf32>
    %88 = arith.addf %87, %86 : vector<8x32xf32>
    %89 = arith.divf %87, %88 : vector<8x32xf32>
    %90 = arith.mulf %81, %63 : vector<8x32xf32>
    %91 = arith.mulf %75, %83 : vector<8x32xf32>
    %92 = arith.addf %90, %91 : vector<8x32xf32>
    %93 = math.tanh %92 : vector<8x32xf32>
    %94 = arith.mulf %89, %93 : vector<8x32xf32>
    %95 = vector.extract_strided_slice %5 {offsets = [24, 0], sizes = [8, 128], strides = [1, 1]} : vector<64x128xf32> to vector<8x128xf32>
    %c0_25 = arith.constant 0 : index
    %c0_26 = arith.constant 0 : index
    %96 = vector.load %arg4[%c0_25, %c0_26] : memref<32x128xf32, #tpu.memory_space<vmem>>, vector<32x128xf32>
    %cst_27 = arith.constant dense<0.000000e+00> : vector<8x128xf32>
    %97 = tpu.matmul %94, %96, %cst_27 {dimension_numbers = #tpu.dot_dimension_numbers<[1], [0], [0], [1], [0, 0, 1, 1], [], []>} : vector<8x32xf32>, vector<32x128xf32>, vector<8x128xf32> -> vector<8x128xf32>
    %98 = arith.addf %95, %97 : vector<8x128xf32>
    %99 = vector.extract_strided_slice %98 {offsets = [0, 0], sizes = [8, 32], strides = [1, 1]} : vector<8x128xf32> to vector<8x32xf32>
    %100 = arith.negf %99 : vector<8x32xf32>
    %101 = math.exp %100 : vector<8x32xf32>
    %cst_28 = arith.constant 1.000000e+00 : f32
    %102 = vector.broadcast %cst_28 : f32 to vector<8x32xf32>
    %103 = arith.addf %102, %101 : vector<8x32xf32>
    %104 = arith.divf %102, %103 : vector<8x32xf32>
    %105 = vector.extract_strided_slice %98 {offsets = [0, 32], sizes = [8, 32], strides = [1, 1]} : vector<8x128xf32> to vector<8x32xf32>
    %106 = arith.negf %105 : vector<8x32xf32>
    %107 = math.exp %106 : vector<8x32xf32>
    %cst_29 = arith.constant 1.000000e+00 : f32
    %108 = vector.broadcast %cst_29 : f32 to vector<8x32xf32>
    %109 = arith.addf %108, %107 : vector<8x32xf32>
    %110 = arith.divf %108, %109 : vector<8x32xf32>
    %111 = vector.extract_strided_slice %98 {offsets = [0, 64], sizes = [8, 32], strides = [1, 1]} : vector<8x128xf32> to vector<8x32xf32>
    %112 = math.tanh %111 : vector<8x32xf32>
    %113 = vector.extract_strided_slice %98 {offsets = [0, 96], sizes = [8, 32], strides = [1, 1]} : vector<8x128xf32> to vector<8x32xf32>
    %114 = arith.negf %113 : vector<8x32xf32>
    %115 = math.exp %114 : vector<8x32xf32>
    %cst_30 = arith.constant 1.000000e+00 : f32
    %116 = vector.broadcast %cst_30 : f32 to vector<8x32xf32>
    %117 = arith.addf %116, %115 : vector<8x32xf32>
    %118 = arith.divf %116, %117 : vector<8x32xf32>
    %119 = arith.mulf %110, %92 : vector<8x32xf32>
    %120 = arith.mulf %104, %112 : vector<8x32xf32>
    %121 = arith.addf %119, %120 : vector<8x32xf32>
    %122 = math.tanh %121 : vector<8x32xf32>
    %123 = arith.mulf %118, %122 : vector<8x32xf32>
    %124 = vector.extract_strided_slice %5 {offsets = [32, 0], sizes = [8, 128], strides = [1, 1]} : vector<64x128xf32> to vector<8x128xf32>
    %c0_31 = arith.constant 0 : index
    %c0_32 = arith.constant 0 : index
    %125 = vector.load %arg4[%c0_31, %c0_32] : memref<32x128xf32, #tpu.memory_space<vmem>>, vector<32x128xf32>
    %cst_33 = arith.constant dense<0.000000e+00> : vector<8x128xf32>
    %126 = tpu.matmul %123, %125, %cst_33 {dimension_numbers = #tpu.dot_dimension_numbers<[1], [0], [0], [1], [0, 0, 1, 1], [], []>} : vector<8x32xf32>, vector<32x128xf32>, vector<8x128xf32> -> vector<8x128xf32>
    %127 = arith.addf %124, %126 : vector<8x128xf32>
    %128 = vector.extract_strided_slice %127 {offsets = [0, 0], sizes = [8, 32], strides = [1, 1]} : vector<8x128xf32> to vector<8x32xf32>
    %129 = arith.negf %128 : vector<8x32xf32>
    %130 = math.exp %129 : vector<8x32xf32>
    %cst_34 = arith.constant 1.000000e+00 : f32
    %131 = vector.broadcast %cst_34 : f32 to vector<8x32xf32>
    %132 = arith.addf %131, %130 : vector<8x32xf32>
    %133 = arith.divf %131, %132 : vector<8x32xf32>
    %134 = vector.extract_strided_slice %127 {offsets = [0, 32], sizes = [8, 32], strides = [1, 1]} : vector<8x128xf32> to vector<8x32xf32>
    %135 = arith.negf %134 : vector<8x32xf32>
    %136 = math.exp %135 : vector<8x32xf32>
    %cst_35 = arith.constant 1.000000e+00 : f32
    %137 = vector.broadcast %cst_35 : f32 to vector<8x32xf32>
    %138 = arith.addf %137, %136 : vector<8x32xf32>
    %139 = arith.divf %137, %138 : vector<8x32xf32>
    %140 = vector.extract_strided_slice %127 {offsets = [0, 64], sizes = [8, 32], strides = [1, 1]} : vector<8x128xf32> to vector<8x32xf32>
    %141 = math.tanh %140 : vector<8x32xf32>
    %142 = vector.extract_strided_slice %127 {offsets = [0, 96], sizes = [8, 32], strides = [1, 1]} : vector<8x128xf32> to vector<8x32xf32>
    %143 = arith.negf %142 : vector<8x32xf32>
    %144 = math.exp %143 : vector<8x32xf32>
    %cst_36 = arith.constant 1.000000e+00 : f32
    %145 = vector.broadcast %cst_36 : f32 to vector<8x32xf32>
    %146 = arith.addf %145, %144 : vector<8x32xf32>
    %147 = arith.divf %145, %146 : vector<8x32xf32>
    %148 = arith.mulf %139, %121 : vector<8x32xf32>
    %149 = arith.mulf %133, %141 : vector<8x32xf32>
    %150 = arith.addf %148, %149 : vector<8x32xf32>
    %151 = math.tanh %150 : vector<8x32xf32>
    %152 = arith.mulf %147, %151 : vector<8x32xf32>
    %153 = vector.extract_strided_slice %5 {offsets = [40, 0], sizes = [8, 128], strides = [1, 1]} : vector<64x128xf32> to vector<8x128xf32>
    %c0_37 = arith.constant 0 : index
    %c0_38 = arith.constant 0 : index
    %154 = vector.load %arg4[%c0_37, %c0_38] : memref<32x128xf32, #tpu.memory_space<vmem>>, vector<32x128xf32>
    %cst_39 = arith.constant dense<0.000000e+00> : vector<8x128xf32>
    %155 = tpu.matmul %152, %154, %cst_39 {dimension_numbers = #tpu.dot_dimension_numbers<[1], [0], [0], [1], [0, 0, 1, 1], [], []>} : vector<8x32xf32>, vector<32x128xf32>, vector<8x128xf32> -> vector<8x128xf32>
    %156 = arith.addf %153, %155 : vector<8x128xf32>
    %157 = vector.extract_strided_slice %156 {offsets = [0, 0], sizes = [8, 32], strides = [1, 1]} : vector<8x128xf32> to vector<8x32xf32>
    %158 = arith.negf %157 : vector<8x32xf32>
    %159 = math.exp %158 : vector<8x32xf32>
    %cst_40 = arith.constant 1.000000e+00 : f32
    %160 = vector.broadcast %cst_40 : f32 to vector<8x32xf32>
    %161 = arith.addf %160, %159 : vector<8x32xf32>
    %162 = arith.divf %160, %161 : vector<8x32xf32>
    %163 = vector.extract_strided_slice %156 {offsets = [0, 32], sizes = [8, 32], strides = [1, 1]} : vector<8x128xf32> to vector<8x32xf32>
    %164 = arith.negf %163 : vector<8x32xf32>
    %165 = math.exp %164 : vector<8x32xf32>
    %cst_41 = arith.constant 1.000000e+00 : f32
    %166 = vector.broadcast %cst_41 : f32 to vector<8x32xf32>
    %167 = arith.addf %166, %165 : vector<8x32xf32>
    %168 = arith.divf %166, %167 : vector<8x32xf32>
    %169 = vector.extract_strided_slice %156 {offsets = [0, 64], sizes = [8, 32], strides = [1, 1]} : vector<8x128xf32> to vector<8x32xf32>
    %170 = math.tanh %169 : vector<8x32xf32>
    %171 = vector.extract_strided_slice %156 {offsets = [0, 96], sizes = [8, 32], strides = [1, 1]} : vector<8x128xf32> to vector<8x32xf32>
    %172 = arith.negf %171 : vector<8x32xf32>
    %173 = math.exp %172 : vector<8x32xf32>
    %cst_42 = arith.constant 1.000000e+00 : f32
    %174 = vector.broadcast %cst_42 : f32 to vector<8x32xf32>
    %175 = arith.addf %174, %173 : vector<8x32xf32>
    %176 = arith.divf %174, %175 : vector<8x32xf32>
    %177 = arith.mulf %168, %150 : vector<8x32xf32>
    %178 = arith.mulf %162, %170 : vector<8x32xf32>
    %179 = arith.addf %177, %178 : vector<8x32xf32>
    %180 = math.tanh %179 : vector<8x32xf32>
    %181 = arith.mulf %176, %180 : vector<8x32xf32>
    %182 = vector.extract_strided_slice %5 {offsets = [48, 0], sizes = [8, 128], strides = [1, 1]} : vector<64x128xf32> to vector<8x128xf32>
    %c0_43 = arith.constant 0 : index
    %c0_44 = arith.constant 0 : index
    %183 = vector.load %arg4[%c0_43, %c0_44] : memref<32x128xf32, #tpu.memory_space<vmem>>, vector<32x128xf32>
    %cst_45 = arith.constant dense<0.000000e+00> : vector<8x128xf32>
    %184 = tpu.matmul %181, %183, %cst_45 {dimension_numbers = #tpu.dot_dimension_numbers<[1], [0], [0], [1], [0, 0, 1, 1], [], []>} : vector<8x32xf32>, vector<32x128xf32>, vector<8x128xf32> -> vector<8x128xf32>
    %185 = arith.addf %182, %184 : vector<8x128xf32>
    %186 = vector.extract_strided_slice %185 {offsets = [0, 0], sizes = [8, 32], strides = [1, 1]} : vector<8x128xf32> to vector<8x32xf32>
    %187 = arith.negf %186 : vector<8x32xf32>
    %188 = math.exp %187 : vector<8x32xf32>
    %cst_46 = arith.constant 1.000000e+00 : f32
    %189 = vector.broadcast %cst_46 : f32 to vector<8x32xf32>
    %190 = arith.addf %189, %188 : vector<8x32xf32>
    %191 = arith.divf %189, %190 : vector<8x32xf32>
    %192 = vector.extract_strided_slice %185 {offsets = [0, 32], sizes = [8, 32], strides = [1, 1]} : vector<8x128xf32> to vector<8x32xf32>
    %193 = arith.negf %192 : vector<8x32xf32>
    %194 = math.exp %193 : vector<8x32xf32>
    %cst_47 = arith.constant 1.000000e+00 : f32
    %195 = vector.broadcast %cst_47 : f32 to vector<8x32xf32>
    %196 = arith.addf %195, %194 : vector<8x32xf32>
    %197 = arith.divf %195, %196 : vector<8x32xf32>
    %198 = vector.extract_strided_slice %185 {offsets = [0, 64], sizes = [8, 32], strides = [1, 1]} : vector<8x128xf32> to vector<8x32xf32>
    %199 = math.tanh %198 : vector<8x32xf32>
    %200 = vector.extract_strided_slice %185 {offsets = [0, 96], sizes = [8, 32], strides = [1, 1]} : vector<8x128xf32> to vector<8x32xf32>
    %201 = arith.negf %200 : vector<8x32xf32>
    %202 = math.exp %201 : vector<8x32xf32>
    %cst_48 = arith.constant 1.000000e+00 : f32
    %203 = vector.broadcast %cst_48 : f32 to vector<8x32xf32>
    %204 = arith.addf %203, %202 : vector<8x32xf32>
    %205 = arith.divf %203, %204 : vector<8x32xf32>
    %206 = arith.mulf %197, %179 : vector<8x32xf32>
    %207 = arith.mulf %191, %199 : vector<8x32xf32>
    %208 = arith.addf %206, %207 : vector<8x32xf32>
    %209 = math.tanh %208 : vector<8x32xf32>
    %210 = arith.mulf %205, %209 : vector<8x32xf32>
    %211 = vector.extract_strided_slice %5 {offsets = [56, 0], sizes = [8, 128], strides = [1, 1]} : vector<64x128xf32> to vector<8x128xf32>
    %c0_49 = arith.constant 0 : index
    %c0_50 = arith.constant 0 : index
    %212 = vector.load %arg4[%c0_49, %c0_50] : memref<32x128xf32, #tpu.memory_space<vmem>>, vector<32x128xf32>
    %cst_51 = arith.constant dense<0.000000e+00> : vector<8x128xf32>
    %213 = tpu.matmul %210, %212, %cst_51 {dimension_numbers = #tpu.dot_dimension_numbers<[1], [0], [0], [1], [0, 0, 1, 1], [], []>} : vector<8x32xf32>, vector<32x128xf32>, vector<8x128xf32> -> vector<8x128xf32>
    %214 = arith.addf %211, %213 : vector<8x128xf32>
    %215 = vector.extract_strided_slice %214 {offsets = [0, 0], sizes = [8, 32], strides = [1, 1]} : vector<8x128xf32> to vector<8x32xf32>
    %216 = arith.negf %215 : vector<8x32xf32>
    %217 = math.exp %216 : vector<8x32xf32>
    %cst_52 = arith.constant 1.000000e+00 : f32
    %218 = vector.broadcast %cst_52 : f32 to vector<8x32xf32>
    %219 = arith.addf %218, %217 : vector<8x32xf32>
    %220 = arith.divf %218, %219 : vector<8x32xf32>
    %221 = vector.extract_strided_slice %214 {offsets = [0, 32], sizes = [8, 32], strides = [1, 1]} : vector<8x128xf32> to vector<8x32xf32>
    %222 = arith.negf %221 : vector<8x32xf32>
    %223 = math.exp %222 : vector<8x32xf32>
    %cst_53 = arith.constant 1.000000e+00 : f32
    %224 = vector.broadcast %cst_53 : f32 to vector<8x32xf32>
    %225 = arith.addf %224, %223 : vector<8x32xf32>
    %226 = arith.divf %224, %225 : vector<8x32xf32>
    %227 = vector.extract_strided_slice %214 {offsets = [0, 64], sizes = [8, 32], strides = [1, 1]} : vector<8x128xf32> to vector<8x32xf32>
    %228 = math.tanh %227 : vector<8x32xf32>
    %229 = vector.extract_strided_slice %214 {offsets = [0, 96], sizes = [8, 32], strides = [1, 1]} : vector<8x128xf32> to vector<8x32xf32>
    %230 = arith.negf %229 : vector<8x32xf32>
    %231 = math.exp %230 : vector<8x32xf32>
    %cst_54 = arith.constant 1.000000e+00 : f32
    %232 = vector.broadcast %cst_54 : f32 to vector<8x32xf32>
    %233 = arith.addf %232, %231 : vector<8x32xf32>
    %234 = arith.divf %232, %233 : vector<8x32xf32>
    %235 = arith.mulf %226, %208 : vector<8x32xf32>
    %236 = arith.mulf %220, %228 : vector<8x32xf32>
    %237 = arith.addf %235, %236 : vector<8x32xf32>
    %238 = math.tanh %237 : vector<8x32xf32>
    %239 = arith.mulf %234, %238 : vector<8x32xf32>
    %c0_55 = arith.constant 0 : index
    %c0_56 = arith.constant 0 : index
    %240 = vector.load %arg5[%c0_55, %c0_56] : memref<8x32xf32, #tpu.memory_space<vmem>>, vector<8x32xf32>
    tpu.vector_store %arg5[%c0_55, %c0_56], %239 {strides = array<i32>} : memref<8x32xf32, #tpu.memory_space<vmem>>, vector<8x32xf32>,
    return
  }
  func.func @transform_0(%arg0: i32) -> (i32, i32) {
    %c0_i32 = arith.constant 0 : i32
    %c0_i32_0 = arith.constant 0 : i32
    %c0_i32_1 = arith.constant 0 : i32
    return %c0_i32, %c0_i32_0 : i32, i32
  }
  func.func @transform_1(%arg0: i32) -> (i32, i32) {
    %c0_i32 = arith.constant 0 : i32
    %c0_i32_0 = arith.constant 0 : i32
    %c0_i32_1 = arith.constant 0 : i32
    return %c0_i32, %c0_i32_0 : i32, i32
  }
  func.func @transform_2(%arg0: i32) -> (i32, i32) {
    %c0_i32 = arith.constant 0 : i32
    %c0_i32_0 = arith.constant 0 : i32
    %c0_i32_1 = arith.constant 0 : i32
    return %c0_i32, %c0_i32_0 : i32, i32
  }
  func.func @transform_3(%arg0: i32) -> (i32, i32) {
    %c0_i32 = arith.constant 0 : i32
    %c0_i32_0 = arith.constant 0 : i32
    %c0_i32_1 = arith.constant 0 : i32
    return %c0_i32, %c0_i32_0 : i32, i32
  }
  func.func @transform_4(%arg0: i32) -> (i32, i32) {
    %c0_i32 = arith.constant 0 : i32
    %c0_i32_0 = arith.constant 0 : i32
    %c0_i32_1 = arith.constant 0 : i32
    return %c0_i32, %c0_i32_0 : i32, i32
  }
}

</mosaic_0001>

<llo_original>
// kernel: tpu_custom_call.1
$region0: #{tpu_custom_call.1}
  #allocation0 [shape = 'u32[]', space=smem, size = 0x4, offset = 0x4, fixed_abs, tag = 'smem constant byte address 0x4 - core index']
  #allocation1 [shape = 'u32[144,128]{1,0:T(1,128)}', space=vmem, size = 0x12000, scoped, tag = 'internal scratch']
  %s0 = inlined_call_operand.vmem [shape: f32[64,9], index: 0, kind: input, shape index: {}]
  %s1 = inlined_call_operand.vmem [shape: f32[9,128], index: 1, kind: input, shape index: {}]
  %s2 = inlined_call_operand.vmem [shape: f32[1,128], index: 2, kind: input, shape index: {}]
  %s3 = inlined_call_operand.vmem [shape: f32[32,128], index: 3, kind: input, shape index: {}]
  %s4 = inlined_call_operand.hbm [shape: f32[8,32], index: 4, kind: output, shape index: {}]
  %s5 = sld [smem:[#allocation0]]
  $region26: #{tpu_custom_call.1} parent=0
    _
  %s7 = ssub.s32 1, %s5
  %s8 = scalar_select 0, %s7, %s5
  $region1: #{tpu_custom_call.1} parent=0
    #allocation2 [shape = 'u8[4096]{0}', space=vmem, size = 0x1000, scoped, tag = 'output window, operand 0, single buffered']
    #allocation3 [shape = 's32[1]{0}', space=sflag, size = 0x4, scoped, tag = 'scoped memory for tpu_custom_call.1']
    %9 = vsyncpa [#allocation3], 0
    // Predicated region
    $region2: #{tpu_custom_call.1} parent=1 // pred_check
      _
    $region3: #{tpu_custom_call.1} parent=1 // pred_check_branch
      %11 = sbr.rel (0) target = $region5
    $region4: #{tpu_custom_call.1} parent=1 // pred_region
      _
    $region5: #{tpu_custom_call.1} parent=1 // pred_fallthru
      _
    // Predicated region
    $region6: #{tpu_custom_call.1} parent=1 // pred_check
      _
    $region7: #{tpu_custom_call.1} parent=1 // pred_check_branch
      %13 = sbr.rel (0) target = $region9
    $region8: #{tpu_custom_call.1} parent=1 // pred_region
      _
    $region9: #{tpu_custom_call.1} parent=1 // pred_fallthru
      _
    // Predicated region
    $region10: #{tpu_custom_call.1} parent=1 // pred_check
      _
    $region11: #{tpu_custom_call.1} parent=1 // pred_check_branch
      %15 = sbr.rel (0) target = $region13
    $region12: #{tpu_custom_call.1} parent=1 // pred_region
      _
    $region13: #{tpu_custom_call.1} parent=1 // pred_fallthru
      _
    // Predicated region
    $region14: #{tpu_custom_call.1} parent=1 // pred_check
      _
    $region15: #{tpu_custom_call.1} parent=1 // pred_check_branch
      %17 = sbr.rel (0) target = $region17
    $region16: #{tpu_custom_call.1} parent=1 // pred_region
      _
    $region17: #{tpu_custom_call.1} parent=1 // pred_fallthru
      _
    %v18 = vld [vmem:[%s0] sm:$0xff]
    %v19 = vld [vmem:[%s0 + $0x8] sm:$0xff]
    %v20 = vld [vmem:[%s0 + $0x10] sm:$0xff]
    %v21 = vld [vmem:[%s0 + $0x18] sm:$0xff]
    %v22 = vld [vmem:[%s0 + $0x20] sm:$0xff]
    %v23 = vld [vmem:[%s0 + $0x28] sm:$0xff]
    %v24 = vld [vmem:[%s0 + $0x30] sm:$0xff]
    %v25 = vld [vmem:[%s0 + $0x38] sm:$0xff]
    %v26 = vld [vmem:[%s1] sm:$0xff]
    %v27 = vld [vmem:[%s1 + $0x8] sm:$0x1]
    %v28 = vld [vmem:[%s2] sm:$0x1]
    %v30 = vlaneseq
    %v31 = vshrl.u32 %v30, 7
    %v32 = vsub.s32 0, %v31
    %v33 = vrot.slane %v28, %v32
    %vm35 = vcmask 72704
    %v37 = vsel %vm35, %v18, 0
    %v40 = vsel %vm35, %v19, 0
    %v43 = vsel %vm35, %v20, 0
    %v46 = vsel %vm35, %v21, 0
    %v49 = vsel %vm35, %v22, 0
    %v52 = vsel %vm35, %v23, 0
    %v55 = vsel %vm35, %v24, 0
    %v58 = vsel %vm35, %v25, 0
    %vm60 = vcmask 1040384
    %v62 = vsel %vm60, %v27, 0
    %64 = vmatprep.subr.mxu0 0.0
    %65 = vmatpush1.msra.mxu0 0.0
    %66 = vmatprep.subr.mxu0 0.0
    %67 = vmatpush1.msra.mxu0 0.0
    %68 = vmatprep.subr.mxu0 0.0
    %69 = vmatpush1.msra.mxu0 0.0
    %70 = vmatprep.subr.mxu0 0.0
    %71 = vmatpush1.msra.mxu0 0.0
    %72 = vmatprep.subr.mxu0 0.0
    %73 = vmatpush1.msra.mxu0 0.0
    %74 = vmatprep.subr.mxu0 0.0
    %75 = vmatpush1.msra.mxu0 0.0
    %76 = vmatprep.subr.mxu0 0.0
    %77 = vmatpush1.msra.mxu0 0.0
    %78 = vmatprep.subr.mxu0 0.0
    %79 = vmatpush1.msra.mxu0 0.0
    %80 = vmatprep.subr.mxu0 0.0
    %81 = vmatpush1.msra.mxu0 0.0
    %82 = vmatprep.subr.mxu0 0.0
    %83 = vmatpush1.msra.mxu0 0.0
    %84 = vmatprep.subr.mxu0 0.0
    %85 = vmatpush1.msra.mxu0 0.0
    %86 = vmatprep.subr.mxu0 0.0
    %87 = vmatpush1.msra.mxu0 0.0
    %88 = vmatprep.subr.mxu0 0.0
    %89 = vmatpush1.msra.mxu0 0.0
    %90 = vmatprep.subr.mxu0 0.0
    %91 = vmatpush1.msra.mxu0 0.0
    %92 = vmatprep.subr.mxu0 0.0
    %93 = vmatpush1.msra.mxu0 %v62
    %94 = vmatprep.subr.mxu0 0.0
    %95 = vmatpush1.msra.mxu0 %v26
    %96 = vmatprep.subr.mxu0 0.0
    %97 = vmatpush2.msra.mxu0 0.0
    %98 = vmatprep.subr.mxu0 0.0
    %99 = vmatpush2.msra.mxu0 0.0
    %100 = vmatprep.subr.mxu0 0.0
    %101 = vmatpush2.msra.mxu0 0.0
    %102 = vmatprep.subr.mxu0 0.0
    %103 = vmatpush2.msra.mxu0 0.0
    %104 = vmatprep.subr.mxu0 0.0
    %105 = vmatpush2.msra.mxu0 0.0
    %106 = vmatprep.subr.mxu0 0.0
    %107 = vmatpush2.msra.mxu0 0.0
    %108 = vmatprep.subr.mxu0 0.0
    %109 = vmatpush2.msra.mxu0 0.0
    %110 = vmatprep.subr.mxu0 0.0
    %111 = vmatpush2.msra.mxu0 0.0
    %112 = vmatprep.subr.mxu0 0.0
    %113 = vmatpush2.msra.mxu0 0.0
    %114 = vmatprep.subr.mxu0 0.0
    %115 = vmatpush2.msra.mxu0 0.0
    %116 = vmatprep.subr.mxu0 0.0
    %117 = vmatpush2.msra.mxu0 0.0
    %118 = vmatprep.subr.mxu0 0.0
    %119 = vmatpush2.msra.mxu0 0.0
    %120 = vmatprep.subr.mxu0 0.0
    %121 = vmatpush2.msra.mxu0 0.0
    %122 = vmatprep.subr.mxu0 0.0
    %123 = vmatpush2.msra.mxu0 0.0
    %124 = vmatprep.subr.mxu0 0.0
    %125 = vmatpush2.msra.mxu0 0.0
    %126 = vmatprep.subr.mxu0 0.0
    %127 = vmatpush2.msra.mxu0 0.0
    %128 = vmatprep.mubr.f32.mxu0 0.0
    %129 = vmatmul.mubr.f32.gmra.mxu0 %v37
    %v130 = vpop.f32.mrf.mxu0
    %v131 = vadd.f32 %v33, %v130
    %v132 = vpop.f32.mrf.mxu0
    %133 = vmatprep.mubr.f32.mxu0 0.0
    %134 = vmatmul.mubr.f32.gmra.mxu0 %v40
    %v135 = vpop.f32.mrf.mxu0
    %v136 = vadd.f32 %v33, %v135
    %v137 = vpop.f32.mrf.mxu0
    %138 = vmatprep.mubr.f32.mxu0 0.0
    %139 = vmatmul.mubr.f32.gmra.mxu0 %v43
    %v140 = vpop.f32.mrf.mxu0
    %v141 = vadd.f32 %v33, %v140
    %v142 = vpop.f32.mrf.mxu0
    %143 = vmatprep.mubr.f32.mxu0 0.0
    %144 = vmatmul.mubr.f32.gmra.mxu0 %v46
    %v145 = vpop.f32.mrf.mxu0
    %v146 = vadd.f32 %v33, %v145
    %v147 = vpop.f32.mrf.mxu0
    %148 = vmatprep.mubr.f32.mxu0 0.0
    %149 = vmatmul.mubr.f32.gmra.mxu0 %v49
    %v150 = vpop.f32.mrf.mxu0
    %v151 = vadd.f32 %v33, %v150
    %v152 = vpop.f32.mrf.mxu0
    %153 = vmatprep.mubr.f32.mxu0 0.0
    %154 = vmatmul.mubr.f32.gmra.mxu0 %v52
    %v155 = vpop.f32.mrf.mxu0
    %v156 = vadd.f32 %v33, %v155
    %v157 = vpop.f32.mrf.mxu0
    %158 = vmatprep.mubr.f32.mxu0 0.0
    %159 = vmatmul.mubr.f32.gmra.mxu0 %v55
    %v160 = vpop.f32.mrf.mxu0
    %v161 = vadd.f32 %v33, %v160
    %v162 = vpop.f32.mrf.mxu0
    %163 = vmatprep.mubr.f32.mxu0 0.0
    %164 = vmatmul.mubr.f32.gmra.mxu0 %v58
    %v165 = vpop.f32.mrf.mxu0
    %v166 = vadd.f32 %v33, %v165
    %v167 = vpop.f32.mrf.mxu0
    %168 = vdwg.mxu0
    %v169 = vld [vmem:[%s3] sm:$0xff]
    %v170 = vld [vmem:[%s3 + $0x8] sm:$0xff]
    %v171 = vld [vmem:[%s3 + $0x10] sm:$0xff]
    %v172 = vld [vmem:[%s3 + $0x18] sm:$0xff]
    %vm173 = vcmask 261120
    %v175 = vsel %vm173, 0.0, 0
    %177 = vmatprep.subr.mxu0 0.0
    %178 = vmatpush1.msra.mxu0 0.0
    %179 = vmatprep.subr.mxu0 0.0
    %180 = vmatpush1.msra.mxu0 0.0
    %181 = vmatprep.subr.mxu0 0.0
    %182 = vmatpush1.msra.mxu0 0.0
    %183 = vmatprep.subr.mxu0 0.0
    %184 = vmatpush1.msra.mxu0 0.0
    %185 = vmatprep.subr.mxu0 0.0
    %186 = vmatpush1.msra.mxu0 0.0
    %187 = vmatprep.subr.mxu0 0.0
    %188 = vmatpush1.msra.mxu0 0.0
    %189 = vmatprep.subr.mxu0 0.0
    %190 = vmatpush1.msra.mxu0 0.0
    %191 = vmatprep.subr.mxu0 0.0
    %192 = vmatpush1.msra.mxu0 0.0
    %193 = vmatprep.subr.mxu0 0.0
    %194 = vmatpush1.msra.mxu0 0.0
    %195 = vmatprep.subr.mxu0 0.0
    %196 = vmatpush1.msra.mxu0 0.0
    %197 = vmatprep.subr.mxu0 0.0
    %198 = vmatpush1.msra.mxu0 0.0
    %199 = vmatprep.subr.mxu0 0.0
    %200 = vmatpush1.msra.mxu0 0.0
    %201 = vmatprep.subr.mxu0 0.0
    %202 = vmatpush1.msra.mxu0 %v172
    %203 = vmatprep.subr.mxu0 0.0
    %204 = vmatpush1.msra.mxu0 %v171
    %205 = vmatprep.subr.mxu0 0.0
    %206 = vmatpush1.msra.mxu0 %v170
    %207 = vmatprep.subr.mxu0 0.0
    %208 = vmatpush1.msra.mxu0 %v169
    %209 = vmatprep.subr.mxu0 0.0
    %210 = vmatpush2.msra.mxu0 0.0
    %211 = vmatprep.subr.mxu0 0.0
    %212 = vmatpush2.msra.mxu0 0.0
    %213 = vmatprep.subr.mxu0 0.0
    %214 = vmatpush2.msra.mxu0 0.0
    %215 = vmatprep.subr.mxu0 0.0
    %216 = vmatpush2.msra.mxu0 0.0
    %217 = vmatprep.subr.mxu0 0.0
    %218 = vmatpush2.msra.mxu0 0.0
    %219 = vmatprep.subr.mxu0 0.0
    %220 = vmatpush2.msra.mxu0 0.0
    %221 = vmatprep.subr.mxu0 0.0
    %222 = vmatpush2.msra.mxu0 0.0
    %223 = vmatprep.subr.mxu0 0.0
    %224 = vmatpush2.msra.mxu0 0.0
    %225 = vmatprep.subr.mxu0 0.0
    %226 = vmatpush2.msra.mxu0 0.0
    %227 = vmatprep.subr.mxu0 0.0
    %228 = vmatpush2.msra.mxu0 0.0
    %229 = vmatprep.subr.mxu0 0.0
    %230 = vmatpush2.msra.mxu0 0.0
    %231 = vmatprep.subr.mxu0 0.0
    %232 = vmatpush2.msra.mxu0 0.0
    %233 = vmatprep.subr.mxu0 0.0
    %234 = vmatpush2.msra.mxu0 0.0
    %235 = vmatprep.subr.mxu0 0.0
    %236 = vmatpush2.msra.mxu0 0.0
    %237 = vmatprep.subr.mxu0 0.0
    %238 = vmatpush2.msra.mxu0 0.0
    %239 = vmatprep.subr.mxu0 0.0
    %240 = vmatpush2.msra.mxu0 0.0
    %241 = vmatprep.mubr.f32.mxu0 0.0
    %242 = vmatmul.mubr.f32.gmra.mxu0 %v175
    %v243 = vpop.f32.mrf.mxu0
    %v244 = vadd.f32 0.0, %v243
    %v245 = vpop.f32.mrf.mxu0
    %246 = vdwg.mxu0
    %v247 = vadd.f32 %v131, %v244
    %v248 = vxor.u32 %v247, 2147483648
    %v249 = vmul.f32 %v248, 1.442695
    %v250 = vpow.pop %v249
    %v251 = vadd.f32 %v250, 1.0
    %v252 = vrcp.pop %v251
    %v253 = vmul.f32 1.0, %v252
    %v254 = vtanh.pop %v247
    %v255 = vmul.f32 %v253, 0.0
    %257 = vrot.lane.b32.xlu0 %v254, 64
    %v258 = vpop.permute.xlu0 %257
    %v260 = vmul.f32 %v253, %v258
    %262 = vrot.lane.b32.xlu0 %v260, 32
    %v263 = vpop.permute.xlu0 %262
    %v265 = vadd.f32 %v255, %v263
    %v266 = vtanh.pop %v265
    %268 = vrot.lane.b32.xlu0 %v266, 64
    %v269 = vpop.permute.xlu0 %268
    %v271 = vmul.f32 %v253, %v269
    %273 = vrot.lane.b32.xlu0 %v271, 32
    %v274 = vpop.permute.xlu0 %273
    %v275 = vsel %vm173, %v274, 0
    %277 = vmatprep.subr.mxu0 0.0
    %278 = vmatpush1.msra.mxu0 0.0
    %279 = vmatprep.subr.mxu0 0.0
    %280 = vmatpush1.msra.mxu0 0.0
    %281 = vmatprep.subr.mxu0 0.0
    %282 = vmatpush1.msra.mxu0 0.0
    %283 = vmatprep.subr.mxu0 0.0
    %284 = vmatpush1.msra.mxu0 0.0
    %285 = vmatprep.subr.mxu0 0.0
    %286 = vmatpush1.msra.mxu0 0.0
    %287 = vmatprep.subr.mxu0 0.0
    %288 = vmatpush1.msra.mxu0 0.0
    %289 = vmatprep.subr.mxu0 0.0
    %290 = vmatpush1.msra.mxu0 0.0
    %291 = vmatprep.subr.mxu0 0.0
    %292 = vmatpush1.msra.mxu0 0.0
    %293 = vmatprep.subr.mxu0 0.0
    %294 = vmatpush1.msra.mxu0 0.0
    %295 = vmatprep.subr.mxu0 0.0
    %296 = vmatpush1.msra.mxu0 0.0
    %297 = vmatprep.subr.mxu0 0.0
    %298 = vmatpush1.msra.mxu0 0.0
    %299 = vmatprep.subr.mxu0 0.0
    %300 = vmatpush1.msra.mxu0 0.0
    %301 = vmatprep.subr.mxu0 0.0
    %302 = vmatpush1.msra.mxu0 %v172
    %303 = vmatprep.subr.mxu0 0.0
    %304 = vmatpush1.msra.mxu0 %v171
    %305 = vmatprep.subr.mxu0 0.0
    %306 = vmatpush1.msra.mxu0 %v170
    %307 = vmatprep.subr.mxu0 0.0
    %308 = vmatpush1.msra.mxu0 %v169
    %309 = vmatprep.subr.mxu0 0.0
    %310 = vmatpush2.msra.mxu0 0.0
    %311 = vmatprep.subr.mxu0 0.0
    %312 = vmatpush2.msra.mxu0 0.0
    %313 = vmatprep.subr.mxu0 0.0
    %314 = vmatpush2.msra.mxu0 0.0
    %315 = vmatprep.subr.mxu0 0.0
    %316 = vmatpush2.msra.mxu0 0.0
    %317 = vmatprep.subr.mxu0 0.0
    %318 = vmatpush2.msra.mxu0 0.0
    %319 = vmatprep.subr.mxu0 0.0
    %320 = vmatpush2.msra.mxu0 0.0
    %321 = vmatprep.subr.mxu0 0.0
    %322 = vmatpush2.msra.mxu0 0.0
    %323 = vmatprep.subr.mxu0 0.0
    %324 = vmatpush2.msra.mxu0 0.0
    %325 = vmatprep.subr.mxu0 0.0
    %326 = vmatpush2.msra.mxu0 0.0
    %327 = vmatprep.subr.mxu0 0.0
    %328 = vmatpush2.msra.mxu0 0.0
    %329 = vmatprep.subr.mxu0 0.0
    %330 = vmatpush2.msra.mxu0 0.0
    %331 = vmatprep.subr.mxu0 0.0
    %332 = vmatpush2.msra.mxu0 0.0
    %333 = vmatprep.subr.mxu0 0.0
    %334 = vmatpush2.msra.mxu0 0.0
    %335 = vmatprep.subr.mxu0 0.0
    %336 = vmatpush2.msra.mxu0 0.0
    %337 = vmatprep.subr.mxu0 0.0
    %338 = vmatpush2.msra.mxu0 0.0
    %339 = vmatprep.subr.mxu0 0.0
    %340 = vmatpush2.msra.mxu0 0.0
    %341 = vmatprep.mubr.f32.mxu0 0.0
    %342 = vmatmul.mubr.f32.gmra.mxu0 %v275
    %v343 = vpop.f32.mrf.mxu0
    %v344 = vadd.f32 0.0, %v343
    %v345 = vpop.f32.mrf.mxu0
    %346 = vdwg.mxu0
    %v347 = vadd.f32 %v136, %v344
    %v348 = vxor.u32 %v347, 2147483648
    %v349 = vmul.f32 %v348, 1.442695
    %v350 = vpow.pop %v349
    %v351 = vadd.f32 %v350, 1.0
    %v352 = vrcp.pop %v351
    %v353 = vmul.f32 1.0, %v352
    %v354 = vtanh.pop %v347
    %v355 = vmul.f32 %v353, %v265
    %357 = vrot.lane.b32.xlu0 %v354, 64
    %v358 = vpop.permute.xlu0 %357
    %v360 = vmul.f32 %v353, %v358
    %362 = vrot.lane.b32.xlu0 %v360, 32
    %v363 = vpop.permute.xlu0 %362
    %v365 = vadd.f32 %v355, %v363
    %v366 = vtanh.pop %v365
    %368 = vrot.lane.b32.xlu0 %v366, 64
    %v369 = vpop.permute.xlu0 %368
    %v371 = vmul.f32 %v353, %v369
    %373 = vrot.lane.b32.xlu0 %v371, 32
    %v374 = vpop.permute.xlu0 %373
    %v375 = vsel %vm173, %v374, 0
    %377 = vmatprep.subr.mxu0 0.0
    %378 = vmatpush1.msra.mxu0 0.0
    %379 = vmatprep.subr.mxu0 0.0
    %380 = vmatpush1.msra.mxu0 0.0
    %381 = vmatprep.subr.mxu0 0.0
    %382 = vmatpush1.msra.mxu0 0.0
    %383 = vmatprep.subr.mxu0 0.0
    %384 = vmatpush1.msra.mxu0 0.0
    %385 = vmatprep.subr.mxu0 0.0
    %386 = vmatpush1.msra.mxu0 0.0
    %387 = vmatprep.subr.mxu0 0.0
    %388 = vmatpush1.msra.mxu0 0.0
    %389 = vmatprep.subr.mxu0 0.0
    %390 = vmatpush1.msra.mxu0 0.0
    %391 = vmatprep.subr.mxu0 0.0
    %392 = vmatpush1.msra.mxu0 0.0
    %393 = vmatprep.subr.mxu0 0.0
    %394 = vmatpush1.msra.mxu0 0.0
    %395 = vmatprep.subr.mxu0 0.0
    %396 = vmatpush1.msra.mxu0 0.0
    %397 = vmatprep.subr.mxu0 0.0
    %398 = vmatpush1.msra.mxu0 0.0
    %399 = vmatprep.subr.mxu0 0.0
    %400 = vmatpush1.msra.mxu0 0.0
    %401 = vmatprep.subr.mxu0 0.0
    %402 = vmatpush1.msra.mxu0 %v172
    %403 = vmatprep.subr.mxu0 0.0
    %404 = vmatpush1.msra.mxu0 %v171
    %405 = vmatprep.subr.mxu0 0.0
    %406 = vmatpush1.msra.mxu0 %v170
    %407 = vmatprep.subr.mxu0 0.0
    %408 = vmatpush1.msra.mxu0 %v169
    %409 = vmatprep.subr.mxu0 0.0
    %410 = vmatpush2.msra.mxu0 0.0
    %411 = vmatprep.subr.mxu0 0.0
    %412 = vmatpush2.msra.mxu0 0.0
    %413 = vmatprep.subr.mxu0 0.0
    %414 = vmatpush2.msra.mxu0 0.0
    %415 = vmatprep.subr.mxu0 0.0
    %416 = vmatpush2.msra.mxu0 0.0
    %417 = vmatprep.subr.mxu0 0.0
    %418 = vmatpush2.msra.mxu0 0.0
    %419 = vmatprep.subr.mxu0 0.0
    %420 = vmatpush2.msra.mxu0 0.0
    %421 = vmatprep.subr.mxu0 0.0
    %422 = vmatpush2.msra.mxu0 0.0
    %423 = vmatprep.subr.mxu0 0.0
    %424 = vmatpush2.msra.mxu0 0.0
    %425 = vmatprep.subr.mxu0 0.0
    %426 = vmatpush2.msra.mxu0 0.0
    %427 = vmatprep.subr.mxu0 0.0
    %428 = vmatpush2.msra.mxu0 0.0
    %429 = vmatprep.subr.mxu0 0.0
    %430 = vmatpush2.msra.mxu0 0.0
    %431 = vmatprep.subr.mxu0 0.0
    %432 = vmatpush2.msra.mxu0 0.0
    %433 = vmatprep.subr.mxu0 0.0
    %434 = vmatpush2.msra.mxu0 0.0
    %435 = vmatprep.subr.mxu0 0.0
    %436 = vmatpush2.msra.mxu0 0.0
    %437 = vmatprep.subr.mxu0 0.0
    %438 = vmatpush2.msra.mxu0 0.0
    %439 = vmatprep.subr.mxu0 0.0
    %440 = vmatpush2.msra.mxu0 0.0
    %441 = vmatprep.mubr.f32.mxu0 0.0
    %442 = vmatmul.mubr.f32.gmra.mxu0 %v375
    %v443 = vpop.f32.mrf.mxu0
    %v444 = vadd.f32 0.0, %v443
    %v445 = vpop.f32.mrf.mxu0
    %446 = vdwg.mxu0
    %v447 = vadd.f32 %v141, %v444
    %v448 = vxor.u32 %v447, 2147483648
    %v449 = vmul.f32 %v448, 1.442695
    %v450 = vpow.pop %v449
    %v451 = vadd.f32 %v450, 1.0
    %v452 = vrcp.pop %v451
    %v453 = vmul.f32 1.0, %v452
    %v454 = vtanh.pop %v447
    %v455 = vmul.f32 %v453, %v365
    %457 = vrot.lane.b32.xlu0 %v454, 64
    %v458 = vpop.permute.xlu0 %457
    %v460 = vmul.f32 %v453, %v458
    %462 = vrot.lane.b32.xlu0 %v460, 32
    %v463 = vpop.permute.xlu0 %462
    %v465 = vadd.f32 %v455, %v463
    %v466 = vtanh.pop %v465
    %468 = vrot.lane.b32.xlu0 %v466, 64
    %v469 = vpop.permute.xlu0 %468
    %v471 = vmul.f32 %v453, %v469
    %473 = vrot.lane.b32.xlu0 %v471, 32
    %v474 = vpop.permute.xlu0 %473
    %v475 = vsel %vm173, %v474, 0
    %477 = vmatprep.subr.mxu0 0.0
    %478 = vmatpush1.msra.mxu0 0.0
    %479 = vmatprep.subr.mxu0 0.0
    %480 = vmatpush1.msra.mxu0 0.0
    %481 = vmatprep.subr.mxu0 0.0
    %482 = vmatpush1.msra.mxu0 0.0
    %483 = vmatprep.subr.mxu0 0.0
    %484 = vmatpush1.msra.mxu0 0.0
    %485 = vmatprep.subr.mxu0 0.0
    %486 = vmatpush1.msra.mxu0 0.0
    %487 = vmatprep.subr.mxu0 0.0
    %488 = vmatpush1.msra.mxu0 0.0
    %489 = vmatprep.subr.mxu0 0.0
    %490 = vmatpush1.msra.mxu0 0.0
    %491 = vmatprep.subr.mxu0 0.0
    %492 = vmatpush1.msra.mxu0 0.0
    %493 = vmatprep.subr.mxu0 0.0
    %494 = vmatpush1.msra.mxu0 0.0
    %495 = vmatprep.subr.mxu0 0.0
    %496 = vmatpush1.msra.mxu0 0.0
    %497 = vmatprep.subr.mxu0 0.0
    %498 = vmatpush1.msra.mxu0 0.0
    %499 = vmatprep.subr.mxu0 0.0
    %500 = vmatpush1.msra.mxu0 0.0
    %501 = vmatprep.subr.mxu0 0.0
    %502 = vmatpush1.msra.mxu0 %v172
    %503 = vmatprep.subr.mxu0 0.0
    %504 = vmatpush1.msra.mxu0 %v171
    %505 = vmatprep.subr.mxu0 0.0
    %506 = vmatpush1.msra.mxu0 %v170
    %507 = vmatprep.subr.mxu0 0.0
    %508 = vmatpush1.msra.mxu0 %v169
    %509 = vmatprep.subr.mxu0 0.0
    %510 = vmatpush2.msra.mxu0 0.0
    %511 = vmatprep.subr.mxu0 0.0
    %512 = vmatpush2.msra.mxu0 0.0
    %513 = vmatprep.subr.mxu0 0.0
    %514 = vmatpush2.msra.mxu0 0.0
    %515 = vmatprep.subr.mxu0 0.0
    %516 = vmatpush2.msra.mxu0 0.0
    %517 = vmatprep.subr.mxu0 0.0
    %518 = vmatpush2.msra.mxu0 0.0
    %519 = vmatprep.subr.mxu0 0.0
    %520 = vmatpush2.msra.mxu0 0.0
    %521 = vmatprep.subr.mxu0 0.0
    %522 = vmatpush2.msra.mxu0 0.0
    %523 = vmatprep.subr.mxu0 0.0
    %524 = vmatpush2.msra.mxu0 0.0
    %525 = vmatprep.subr.mxu0 0.0
    %526 = vmatpush2.msra.mxu0 0.0
    %527 = vmatprep.subr.mxu0 0.0
    %528 = vmatpush2.msra.mxu0 0.0
    %529 = vmatprep.subr.mxu0 0.0
    %530 = vmatpush2.msra.mxu0 0.0
    %531 = vmatprep.subr.mxu0 0.0
    %532 = vmatpush2.msra.mxu0 0.0
    %533 = vmatprep.subr.mxu0 0.0
    %534 = vmatpush2.msra.mxu0 0.0
    %535 = vmatprep.subr.mxu0 0.0
    %536 = vmatpush2.msra.mxu0 0.0
    %537 = vmatprep.subr.mxu0 0.0
    %538 = vmatpush2.msra.mxu0 0.0
    %539 = vmatprep.subr.mxu0 0.0
    %540 = vmatpush2.msra.mxu0 0.0
    %541 = vmatprep.mubr.f32.mxu0 0.0
    %542 = vmatmul.mubr.f32.gmra.mxu0 %v475
    %v543 = vpop.f32.mrf.mxu0
    %v544 = vadd.f32 0.0, %v543
    %v545 = vpop.f32.mrf.mxu0
    %546 = vdwg.mxu0
    %v547 = vadd.f32 %v146, %v544
    %v548 = vxor.u32 %v547, 2147483648
    %v549 = vmul.f32 %v548, 1.442695
    %v550 = vpow.pop %v549
    %v551 = vadd.f32 %v550, 1.0
    %v552 = vrcp.pop %v551
    %v553 = vmul.f32 1.0, %v552
    %v554 = vtanh.pop %v547
    %v555 = vmul.f32 %v553, %v465
    %557 = vrot.lane.b32.xlu0 %v554, 64
    %v558 = vpop.permute.xlu0 %557
    %v560 = vmul.f32 %v553, %v558
    %562 = vrot.lane.b32.xlu0 %v560, 32
    %v563 = vpop.permute.xlu0 %562
    %v565 = vadd.f32 %v555, %v563
    %v566 = vtanh.pop %v565
    %568 = vrot.lane.b32.xlu0 %v566, 64
    %v569 = vpop.permute.xlu0 %568
    %v571 = vmul.f32 %v553, %v569
    %573 = vrot.lane.b32.xlu0 %v571, 32
    %v574 = vpop.permute.xlu0 %573
    %v575 = vsel %vm173, %v574, 0
    %577 = vmatprep.subr.mxu0 0.0
    %578 = vmatpush1.msra.mxu0 0.0
    %579 = vmatprep.subr.mxu0 0.0
    %580 = vmatpush1.msra.mxu0 0.0
    %581 = vmatprep.subr.mxu0 0.0
    %582 = vmatpush1.msra.mxu0 0.0
    %583 = vmatprep.subr.mxu0 0.0
    %584 = vmatpush1.msra.mxu0 0.0
    %585 = vmatprep.subr.mxu0 0.0
    %586 = vmatpush1.msra.mxu0 0.0
    %587 = vmatprep.subr.mxu0 0.0
    %588 = vmatpush1.msra.mxu0 0.0
    %589 = vmatprep.subr.mxu0 0.0
    %590 = vmatpush1.msra.mxu0 0.0
    %591 = vmatprep.subr.mxu0 0.0
    %592 = vmatpush1.msra.mxu0 0.0
    %593 = vmatprep.subr.mxu0 0.0
    %594 = vmatpush1.msra.mxu0 0.0
    %595 = vmatprep.subr.mxu0 0.0
    %596 = vmatpush1.msra.mxu0 0.0
    %597 = vmatprep.subr.mxu0 0.0
    %598 = vmatpush1.msra.mxu0 0.0
    %599 = vmatprep.subr.mxu0 0.0
    %600 = vmatpush1.msra.mxu0 0.0
    %601 = vmatprep.subr.mxu0 0.0
    %602 = vmatpush1.msra.mxu0 %v172
    %603 = vmatprep.subr.mxu0 0.0
    %604 = vmatpush1.msra.mxu0 %v171
    %605 = vmatprep.subr.mxu0 0.0
    %606 = vmatpush1.msra.mxu0 %v170
    %607 = vmatprep.subr.mxu0 0.0
    %608 = vmatpush1.msra.mxu0 %v169
    %609 = vmatprep.subr.mxu0 0.0
    %610 = vmatpush2.msra.mxu0 0.0
    %611 = vmatprep.subr.mxu0 0.0
    %612 = vmatpush2.msra.mxu0 0.0
    %613 = vmatprep.subr.mxu0 0.0
    %614 = vmatpush2.msra.mxu0 0.0
    %615 = vmatprep.subr.mxu0 0.0
    %616 = vmatpush2.msra.mxu0 0.0
    %617 = vmatprep.subr.mxu0 0.0
    %618 = vmatpush2.msra.mxu0 0.0
    %619 = vmatprep.subr.mxu0 0.0
    %620 = vmatpush2.msra.mxu0 0.0
    %621 = vmatprep.subr.mxu0 0.0
    %622 = vmatpush2.msra.mxu0 0.0
    %623 = vmatprep.subr.mxu0 0.0
    %624 = vmatpush2.msra.mxu0 0.0
    %625 = vmatprep.subr.mxu0 0.0
    %626 = vmatpush2.msra.mxu0 0.0
    %627 = vmatprep.subr.mxu0 0.0
    %628 = vmatpush2.msra.mxu0 0.0
    %629 = vmatprep.subr.mxu0 0.0
    %630 = vmatpush2.msra.mxu0 0.0
    %631 = vmatprep.subr.mxu0 0.0
    %632 = vmatpush2.msra.mxu0 0.0
    %633 = vmatprep.subr.mxu0 0.0
    %634 = vmatpush2.msra.mxu0 0.0
    %635 = vmatprep.subr.mxu0 0.0
    %636 = vmatpush2.msra.mxu0 0.0
    %637 = vmatprep.subr.mxu0 0.0
    %638 = vmatpush2.msra.mxu0 0.0
    %639 = vmatprep.subr.mxu0 0.0
    %640 = vmatpush2.msra.mxu0 0.0
    %641 = vmatprep.mubr.f32.mxu0 0.0
    %642 = vmatmul.mubr.f32.gmra.mxu0 %v575
    %v643 = vpop.f32.mrf.mxu0
    %v644 = vadd.f32 0.0, %v643
    %v645 = vpop.f32.mrf.mxu0
    %646 = vdwg.mxu0
    %v647 = vadd.f32 %v151, %v644
    %v648 = vxor.u32 %v647, 2147483648
    %v649 = vmul.f32 %v648, 1.442695
    %v650 = vpow.pop %v649
    %v651 = vadd.f32 %v650, 1.0
    %v652 = vrcp.pop %v651
    %v653 = vmul.f32 1.0, %v652
    %v654 = vtanh.pop %v647
    %v655 = vmul.f32 %v653, %v565
    %657 = vrot.lane.b32.xlu0 %v654, 64
    %v658 = vpop.permute.xlu0 %657
    %v660 = vmul.f32 %v653, %v658
    %662 = vrot.lane.b32.xlu0 %v660, 32
    %v663 = vpop.permute.xlu0 %662
    %v665 = vadd.f32 %v655, %v663
    %v666 = vtanh.pop %v665
    %668 = vrot.lane.b32.xlu0 %v666, 64
    %v669 = vpop.permute.xlu0 %668
    %v671 = vmul.f32 %v653, %v669
    %673 = vrot.lane.b32.xlu0 %v671, 32
    %v674 = vpop.permute.xlu0 %673
    %v675 = vsel %vm173, %v674, 0
    %677 = vmatprep.subr.mxu0 0.0
    %678 = vmatpush1.msra.mxu0 0.0
    %679 = vmatprep.subr.mxu0 0.0
    %680 = vmatpush1.msra.mxu0 0.0
    %681 = vmatprep.subr.mxu0 0.0
    %682 = vmatpush1.msra.mxu0 0.0
    %683 = vmatprep.subr.mxu0 0.0
    %684 = vmatpush1.msra.mxu0 0.0
    %685 = vmatprep.subr.mxu0 0.0
    %686 = vmatpush1.msra.mxu0 0.0
    %687 = vmatprep.subr.mxu0 0.0
    %688 = vmatpush1.msra.mxu0 0.0
    %689 = vmatprep.subr.mxu0 0.0
    %690 = vmatpush1.msra.mxu0 0.0
    %691 = vmatprep.subr.mxu0 0.0
    %692 = vmatpush1.msra.mxu0 0.0
    %693 = vmatprep.subr.mxu0 0.0
    %694 = vmatpush1.msra.mxu0 0.0
    %695 = vmatprep.subr.mxu0 0.0
    %696 = vmatpush1.msra.mxu0 0.0
    %697 = vmatprep.subr.mxu0 0.0
    %698 = vmatpush1.msra.mxu0 0.0
    %699 = vmatprep.subr.mxu0 0.0
    %700 = vmatpush1.msra.mxu0 0.0
    %701 = vmatprep.subr.mxu0 0.0
    %702 = vmatpush1.msra.mxu0 %v172
    %703 = vmatprep.subr.mxu0 0.0
    %704 = vmatpush1.msra.mxu0 %v171
    %705 = vmatprep.subr.mxu0 0.0
    %706 = vmatpush1.msra.mxu0 %v170
    %707 = vmatprep.subr.mxu0 0.0
    %708 = vmatpush1.msra.mxu0 %v169
    %709 = vmatprep.subr.mxu0 0.0
    %710 = vmatpush2.msra.mxu0 0.0
    %711 = vmatprep.subr.mxu0 0.0
    %712 = vmatpush2.msra.mxu0 0.0
    %713 = vmatprep.subr.mxu0 0.0
    %714 = vmatpush2.msra.mxu0 0.0
    %715 = vmatprep.subr.mxu0 0.0
    %716 = vmatpush2.msra.mxu0 0.0
    %717 = vmatprep.subr.mxu0 0.0
    %718 = vmatpush2.msra.mxu0 0.0
    %719 = vmatprep.subr.mxu0 0.0
    %720 = vmatpush2.msra.mxu0 0.0
    %721 = vmatprep.subr.mxu0 0.0
    %722 = vmatpush2.msra.mxu0 0.0
    %723 = vmatprep.subr.mxu0 0.0
    %724 = vmatpush2.msra.mxu0 0.0
    %725 = vmatprep.subr.mxu0 0.0
    %726 = vmatpush2.msra.mxu0 0.0
    %727 = vmatprep.subr.mxu0 0.0
    %728 = vmatpush2.msra.mxu0 0.0
    %729 = vmatprep.subr.mxu0 0.0
    %730 = vmatpush2.msra.mxu0 0.0
    %731 = vmatprep.subr.mxu0 0.0
    %732 = vmatpush2.msra.mxu0 0.0
    %733 = vmatprep.subr.mxu0 0.0
    %734 = vmatpush2.msra.mxu0 0.0
    %735 = vmatprep.subr.mxu0 0.0
    %736 = vmatpush2.msra.mxu0 0.0
    %737 = vmatprep.subr.mxu0 0.0
    %738 = vmatpush2.msra.mxu0 0.0
    %739 = vmatprep.subr.mxu0 0.0
    %740 = vmatpush2.msra.mxu0 0.0
    %741 = vmatprep.mubr.f32.mxu0 0.0
    %742 = vmatmul.mubr.f32.gmra.mxu0 %v675
    %v743 = vpop.f32.mrf.mxu0
    %v744 = vadd.f32 0.0, %v743
    %v745 = vpop.f32.mrf.mxu0
    %746 = vdwg.mxu0
    %v747 = vadd.f32 %v156, %v744
    %v748 = vxor.u32 %v747, 2147483648
    %v749 = vmul.f32 %v748, 1.442695
    %v750 = vpow.pop %v749
    %v751 = vadd.f32 %v750, 1.0
    %v752 = vrcp.pop %v751
    %v753 = vmul.f32 1.0, %v752
    %v754 = vtanh.pop %v747
    %v755 = vmul.f32 %v753, %v665
    %757 = vrot.lane.b32.xlu0 %v754, 64
    %v758 = vpop.permute.xlu0 %757
    %v760 = vmul.f32 %v753, %v758
    %762 = vrot.lane.b32.xlu0 %v760, 32
    %v763 = vpop.permute.xlu0 %762
    %v765 = vadd.f32 %v755, %v763
    %v766 = vtanh.pop %v765
    %768 = vrot.lane.b32.xlu0 %v766, 64
    %v769 = vpop.permute.xlu0 %768
    %v771 = vmul.f32 %v753, %v769
    %773 = vrot.lane.b32.xlu0 %v771, 32
    %v774 = vpop.permute.xlu0 %773
    %v775 = vsel %vm173, %v774, 0
    %777 = vmatprep.subr.mxu0 0.0
    %778 = vmatpush1.msra.mxu0 0.0
    %779 = vmatprep.subr.mxu0 0.0
    %780 = vmatpush1.msra.mxu0 0.0
    %781 = vmatprep.subr.mxu0 0.0
    %782 = vmatpush1.msra.mxu0 0.0
    %783 = vmatprep.subr.mxu0 0.0
    %784 = vmatpush1.msra.mxu0 0.0
    %785 = vmatprep.subr.mxu0 0.0
    %786 = vmatpush1.msra.mxu0 0.0
    %787 = vmatprep.subr.mxu0 0.0
    %788 = vmatpush1.msra.mxu0 0.0
    %789 = vmatprep.subr.mxu0 0.0
    %790 = vmatpush1.msra.mxu0 0.0
    %791 = vmatprep.subr.mxu0 0.0
    %792 = vmatpush1.msra.mxu0 0.0
    %793 = vmatprep.subr.mxu0 0.0
    %794 = vmatpush1.msra.mxu0 0.0
    %795 = vmatprep.subr.mxu0 0.0
    %796 = vmatpush1.msra.mxu0 0.0
    %797 = vmatprep.subr.mxu0 0.0
    %798 = vmatpush1.msra.mxu0 0.0
    %799 = vmatprep.subr.mxu0 0.0
    %800 = vmatpush1.msra.mxu0 0.0
    %801 = vmatprep.subr.mxu0 0.0
    %802 = vmatpush1.msra.mxu0 %v172
    %803 = vmatprep.subr.mxu0 0.0
    %804 = vmatpush1.msra.mxu0 %v171
    %805 = vmatprep.subr.mxu0 0.0
    %806 = vmatpush1.msra.mxu0 %v170
    %807 = vmatprep.subr.mxu0 0.0
    %808 = vmatpush1.msra.mxu0 %v169
    %809 = vmatprep.subr.mxu0 0.0
    %810 = vmatpush2.msra.mxu0 0.0
    %811 = vmatprep.subr.mxu0 0.0
    %812 = vmatpush2.msra.mxu0 0.0
    %813 = vmatprep.subr.mxu0 0.0
    %814 = vmatpush2.msra.mxu0 0.0
    %815 = vmatprep.subr.mxu0 0.0
    %816 = vmatpush2.msra.mxu0 0.0
    %817 = vmatprep.subr.mxu0 0.0
    %818 = vmatpush2.msra.mxu0 0.0
    %819 = vmatprep.subr.mxu0 0.0
    %820 = vmatpush2.msra.mxu0 0.0
    %821 = vmatprep.subr.mxu0 0.0
    %822 = vmatpush2.msra.mxu0 0.0
    %823 = vmatprep.subr.mxu0 0.0
    %824 = vmatpush2.msra.mxu0 0.0
    %825 = vmatprep.subr.mxu0 0.0
    %826 = vmatpush2.msra.mxu0 0.0
    %827 = vmatprep.subr.mxu0 0.0
    %828 = vmatpush2.msra.mxu0 0.0
    %829 = vmatprep.subr.mxu0 0.0
    %830 = vmatpush2.msra.mxu0 0.0
    %831 = vmatprep.subr.mxu0 0.0
    %832 = vmatpush2.msra.mxu0 0.0
    %833 = vmatprep.subr.mxu0 0.0
    %834 = vmatpush2.msra.mxu0 0.0
    %835 = vmatprep.subr.mxu0 0.0
    %836 = vmatpush2.msra.mxu0 0.0
    %837 = vmatprep.subr.mxu0 0.0
    %838 = vmatpush2.msra.mxu0 0.0
    %839 = vmatprep.subr.mxu0 0.0
    %840 = vmatpush2.msra.mxu0 0.0
    %841 = vmatprep.mubr.f32.mxu0 0.0
    %842 = vmatmul.mubr.f32.gmra.mxu0 %v775
    %v843 = vpop.f32.mrf.mxu0
    %v844 = vadd.f32 0.0, %v843
    %v845 = vpop.f32.mrf.mxu0
    %846 = vdwg.mxu0
    %v847 = vadd.f32 %v161, %v844
    %v848 = vxor.u32 %v847, 2147483648
    %v849 = vmul.f32 %v848, 1.442695
    %v850 = vpow.pop %v849
    %v851 = vadd.f32 %v850, 1.0
    %v852 = vrcp.pop %v851
    %v853 = vmul.f32 1.0, %v852
    %v854 = vtanh.pop %v847
    %v855 = vmul.f32 %v853, %v765
    %857 = vrot.lane.b32.xlu0 %v854, 64
    %v858 = vpop.permute.xlu0 %857
    %v860 = vmul.f32 %v853, %v858
    %862 = vrot.lane.b32.xlu0 %v860, 32
    %v863 = vpop.permute.xlu0 %862
    %v865 = vadd.f32 %v855, %v863
    %v866 = vtanh.pop %v865
    %868 = vrot.lane.b32.xlu0 %v866, 64
    %v869 = vpop.permute.xlu0 %868
    %v871 = vmul.f32 %v853, %v869
    %873 = vrot.lane.b32.xlu0 %v871, 32
    %v874 = vpop.permute.xlu0 %873
    %v875 = vsel %vm173, %v874, 0
    %877 = vmatprep.subr.mxu0 0.0
    %878 = vmatpush1.msra.mxu0 0.0
    %879 = vmatprep.subr.mxu0 0.0
    %880 = vmatpush1.msra.mxu0 0.0
    %881 = vmatprep.subr.mxu0 0.0
    %882 = vmatpush1.msra.mxu0 0.0
    %883 = vmatprep.subr.mxu0 0.0
    %884 = vmatpush1.msra.mxu0 0.0
    %885 = vmatprep.subr.mxu0 0.0
    %886 = vmatpush1.msra.mxu0 0.0
    %887 = vmatprep.subr.mxu0 0.0
    %888 = vmatpush1.msra.mxu0 0.0
    %889 = vmatprep.subr.mxu0 0.0
    %890 = vmatpush1.msra.mxu0 0.0
    %891 = vmatprep.subr.mxu0 0.0
    %892 = vmatpush1.msra.mxu0 0.0
    %893 = vmatprep.subr.mxu0 0.0
    %894 = vmatpush1.msra.mxu0 0.0
    %895 = vmatprep.subr.mxu0 0.0
    %896 = vmatpush1.msra.mxu0 0.0
    %897 = vmatprep.subr.mxu0 0.0
    %898 = vmatpush1.msra.mxu0 0.0
    %899 = vmatprep.subr.mxu0 0.0
    %900 = vmatpush1.msra.mxu0 0.0
    %901 = vmatprep.subr.mxu0 0.0
    %902 = vmatpush1.msra.mxu0 %v172
    %903 = vmatprep.subr.mxu0 0.0
    %904 = vmatpush1.msra.mxu0 %v171
    %905 = vmatprep.subr.mxu0 0.0
    %906 = vmatpush1.msra.mxu0 %v170
    %907 = vmatprep.subr.mxu0 0.0
    %908 = vmatpush1.msra.mxu0 %v169
    %909 = vmatprep.subr.mxu0 0.0
    %910 = vmatpush2.msra.mxu0 0.0
    %911 = vmatprep.subr.mxu0 0.0
    %912 = vmatpush2.msra.mxu0 0.0
    %913 = vmatprep.subr.mxu0 0.0
    %914 = vmatpush2.msra.mxu0 0.0
    %915 = vmatprep.subr.mxu0 0.0
    %916 = vmatpush2.msra.mxu0 0.0
    %917 = vmatprep.subr.mxu0 0.0
    %918 = vmatpush2.msra.mxu0 0.0
    %919 = vmatprep.subr.mxu0 0.0
    %920 = vmatpush2.msra.mxu0 0.0
    %921 = vmatprep.subr.mxu0 0.0
    %922 = vmatpush2.msra.mxu0 0.0
    %923 = vmatprep.subr.mxu0 0.0
    %924 = vmatpush2.msra.mxu0 0.0
    %925 = vmatprep.subr.mxu0 0.0
    %926 = vmatpush2.msra.mxu0 0.0
    %927 = vmatprep.subr.mxu0 0.0
    %928 = vmatpush2.msra.mxu0 0.0
    %929 = vmatprep.subr.mxu0 0.0
    %930 = vmatpush2.msra.mxu0 0.0
    %931 = vmatprep.subr.mxu0 0.0
    %932 = vmatpush2.msra.mxu0 0.0
    %933 = vmatprep.subr.mxu0 0.0
    %934 = vmatpush2.msra.mxu0 0.0
    %935 = vmatprep.subr.mxu0 0.0
    %936 = vmatpush2.msra.mxu0 0.0
    %937 = vmatprep.subr.mxu0 0.0
    %938 = vmatpush2.msra.mxu0 0.0
    %939 = vmatprep.subr.mxu0 0.0
    %940 = vmatpush2.msra.mxu0 0.0
    %941 = vmatprep.mubr.f32.mxu0 0.0
    %942 = vmatmul.mubr.f32.gmra.mxu0 %v875
    %v943 = vpop.f32.mrf.mxu0
    %v944 = vadd.f32 0.0, %v943
    %v945 = vpop.f32.mrf.mxu0
    %946 = vdwg.mxu0
    %v947 = vadd.f32 %v166, %v944
    %v948 = vxor.u32 %v947, 2147483648
    %v949 = vmul.f32 %v948, 1.442695
    %v950 = vpow.pop %v949
    %v951 = vadd.f32 %v950, 1.0
    %v952 = vrcp.pop %v951
    %v953 = vmul.f32 1.0, %v952
    %v954 = vtanh.pop %v947
    %v955 = vmul.f32 %v953, %v865
    %957 = vrot.lane.b32.xlu0 %v954, 64
    %v958 = vpop.permute.xlu0 %957
    %v960 = vmul.f32 %v953, %v958
    %962 = vrot.lane.b32.xlu0 %v960, 32
    %v963 = vpop.permute.xlu0 %962
    %v965 = vadd.f32 %v955, %v963
    %v966 = vtanh.pop %v965
    %968 = vrot.lane.b32.xlu0 %v966, 64
    %v969 = vpop.permute.xlu0 %968
    %v971 = vmul.f32 %v953, %v969
    %973 = vrot.lane.b32.xlu0 %v971, 32
    %v974 = vpop.permute.xlu0 %973
    %976 = vst.msk [vmem:[#allocation2] sm:$0xff] %vm173, %v974
    // Predicated region
    $region18: #{tpu_custom_call.1} parent=1 // pred_check
      _
    $region19: #{tpu_custom_call.1} parent=1 // pred_check_branch
      %978 = sbr.rel (0) target = $region21
    $region20: #{tpu_custom_call.1} parent=1 // pred_region
      %s980 = ssub.s32 128, 128
      %981 = vsyncadd [#allocation3], %s980
      %s983 = sshll.u32 [#allocation2], 4
      %s984 = int_to_ptr.vmem [resolvable:$true] %s983
      %986 = dma.vmem_to_hbm [thread:$0]  %s984, 128, %s4, [#allocation3]
    $region21: #{tpu_custom_call.1} parent=1 // pred_fallthru
      _
    // Predicated region
    $region22: #{tpu_custom_call.1} parent=1 // pred_check
      _
    $region23: #{tpu_custom_call.1} parent=1 // pred_check_branch
      %988 = sbr.rel (0) target = $region25
    $region24: #{tpu_custom_call.1} parent=1 // pred_region
      %989 = dma.done [#allocation3], 128
    $region25: #{tpu_custom_call.1} parent=1 // pred_fallthru
      _
    %990 = vsyncpa [#allocation3], 1

</llo_original>
